<compile_context>
chip_gen: v7x
topology: tpu7x:2x2x1
jax: 0.10.0
libtpu: 0.0.40
codegen_flags: <defaults>
</compile_context>

<pallas_src>
import functools

import jax
import jax.numpy as jnp
from jax.experimental import pallas as pl
from jax.experimental.pallas import tpu as pltpu

LANE = 128


def _round_up(x, m):
    return ((x + m - 1) // m) * m


def _row_tile(m):
    # Largest row tile (multiple of 8) that divides m; fall back to full m.
    for t in (1024, 512, 256, 128, 64, 32, 16, 8):
        if m % t == 0:
            return t
    return m


# ------------------------------- Pallas kernels -------------------------------

def _bn_stats_kernel(x_ref, gamma_ref, beta_ref, scale_ref, shift_ref,
                     sum_ref, sq_ref, *, eps, inv_m):
    """Training-mode BN batch statistics -> per-channel (scale, shift).

    Gridded reduction over row tiles of x [M, C]; sums accumulate in VMEM
    scratch, scale/shift are produced on the last grid step.
    """
    i = pl.program_id(0)

    @pl.when(i == 0)
    def _():
        sum_ref[...] = jnp.zeros_like(sum_ref)
        sq_ref[...] = jnp.zeros_like(sq_ref)

    x = x_ref[...].astype(jnp.float32)
    sum_ref[...] += jnp.sum(x, axis=0, keepdims=True)
    sq_ref[...] += jnp.sum(x * x, axis=0, keepdims=True)

    @pl.when(i == pl.num_programs(0) - 1)
    def _():
        mean = sum_ref[...] * inv_m
        # clamp: E[x^2] - mean^2 can cancel slightly negative
        var = jnp.maximum(sq_ref[...] * inv_m - mean * mean, 0.0)
        scale = gamma_ref[...] * jax.lax.rsqrt(var + eps)
        scale_ref[...] = scale
        shift_ref[...] = beta_ref[...] - mean * scale


def _bn_relu(x, scale_ref, shift_ref):
    c = x.shape[-1]
    s = scale_ref[...].reshape(1, 1, c)
    b = shift_ref[...].reshape(1, 1, c)
    return jnp.maximum(x * s + b, 0.0)


def _pad_act_to_scratch(act, apad_ref, h, w):
    # zero border (conv padding), then write the BN+ReLU'd interior
    apad_ref[...] = jnp.zeros_like(apad_ref)
    apad_ref[1:h + 1, 1:w + 1, :] = act.astype(apad_ref.dtype)


def _conv3x3_acc(apad_ref, w_ref, ho, wo, stride):
    """3x3 'valid' conv over the zero-padded activation as 9 shifted MXU dots."""
    cin = apad_ref.shape[-1]
    cout = w_ref.shape[-1]
    acc = jnp.zeros((ho * wo, cout), jnp.float32)
    for dy in range(3):
        for dx in range(3):
            if stride == 1:
                tap = apad_ref[dy:dy + ho, dx:dx + wo, :]
            else:
                tap = apad_ref[pl.ds(dy, ho, stride), pl.ds(dx, wo, stride), :]
            acc = acc + jnp.dot(tap.reshape(ho * wo, cin).astype(jnp.bfloat16),
                                w_ref[dy * 3 + dx],
                                preferred_element_type=jnp.float32)
    return acc


def _conv1_kernel(x_ref, scale_ref, shift_ref, w_ref, o_ref, apad_ref, *, stride):
    """out = conv3x3_stride(relu(bn1(x)))  -- one batch element per grid step."""
    _, h, w, _ = x_ref.shape
    _, ho, wo, cout = o_ref.shape
    act = _bn_relu(x_ref[0].astype(jnp.float32), scale_ref, shift_ref)
    _pad_act_to_scratch(act, apad_ref, h, w)
    acc = _conv3x3_acc(apad_ref, w_ref, ho, wo, stride)
    o_ref[0] = acc.reshape(ho, wo, cout)


def _conv2_id_kernel(y_ref, scale_ref, shift_ref, w_ref, res_ref, o_ref, apad_ref):
    """out = conv3x3(relu(bn2(y))) + residual   (identity shortcut)."""
    _, h, w, _ = y_ref.shape
    cout = o_ref.shape[-1]
    act = _bn_relu(y_ref[0], scale_ref, shift_ref)
    _pad_act_to_scratch(act, apad_ref, h, w)
    acc = _conv3x3_acc(apad_ref, w_ref, h, w, 1)
    o_ref[0] = acc.reshape(h, w, cout) + res_ref[0]


def _conv2_proj_kernel(y_ref, scale2_ref, shift2_ref, w2_ref,
                       xs_ref, scale1_ref, shift1_ref, ws_ref,
                       o_ref, apad_ref):
    """out = conv3x3(relu(bn2(y))) + conv1x1(relu(bn1(x_strided)))  (projection)."""
    _, h, w, _ = y_ref.shape
    cout = o_ref.shape[-1]
    act2 = _bn_relu(y_ref[0], scale2_ref, shift2_ref)
    _pad_act_to_scratch(act2, apad_ref, h, w)
    acc = _conv3x3_acc(apad_ref, w2_ref, h, w, 1)
    # fused 1x1 shortcut (recomputes cheap BN1+ReLU on the strided input tile)
    cin = xs_ref.shape[-1]
    act1 = _bn_relu(xs_ref[0].astype(jnp.float32), scale1_ref, shift1_ref)
    res = jnp.dot(act1.reshape(h * w, cin).astype(jnp.bfloat16), ws_ref[...],
                  preferred_element_type=jnp.float32)
    o_ref[0] = (acc + res).reshape(h, w, cout)


# ------------------------------ Pallas wrappers --------------------------------

def _bn_scale_shift(x2, gamma, beta, eps):
    m, c = x2.shape
    tm = _row_tile(m)
    kernel = functools.partial(_bn_stats_kernel, eps=eps, inv_m=1.0 / m)
    return pl.pallas_call(
        kernel,
        grid=(m // tm,),
        in_specs=[pl.BlockSpec((tm, c), lambda i: (i, 0)),
                  pl.BlockSpec((1, c), lambda i: (0, 0)),
                  pl.BlockSpec((1, c), lambda i: (0, 0))],
        out_specs=(pl.BlockSpec((1, c), lambda i: (0, 0)),
                   pl.BlockSpec((1, c), lambda i: (0, 0))),
        out_shape=(jax.ShapeDtypeStruct((1, c), jnp.float32),
                   jax.ShapeDtypeStruct((1, c), jnp.float32)),
        scratch_shapes=[pltpu.VMEM((1, c), jnp.float32),
                        pltpu.VMEM((1, c), jnp.float32)],
        compiler_params=pltpu.CompilerParams(
            dimension_semantics=("arbitrary",)),
    )(x2, gamma, beta)


def _conv1(x, scale, shift, w9, stride):
    n, h, w, cin = x.shape
    cout = w9.shape[-1]
    ho = (h - 1) // stride + 1
    wo = (w - 1) // stride + 1
    return pl.pallas_call(
        functools.partial(_conv1_kernel, stride=stride),
        grid=(n,),
        in_specs=[pl.BlockSpec((1, h, w, cin), lambda i: (i, 0, 0, 0)),
                  pl.BlockSpec((1, cin), lambda i: (0, 0)),
                  pl.BlockSpec((1, cin), lambda i: (0, 0)),
                  pl.BlockSpec((9, cin, cout), lambda i: (0, 0, 0))],
        out_specs=pl.BlockSpec((1, ho, wo, cout), lambda i: (i, 0, 0, 0)),
        out_shape=jax.ShapeDtypeStruct((n, ho, wo, cout), jnp.float32),
        scratch_shapes=[pltpu.VMEM((h + 2, w + 2, cin), jnp.float32)],
        compiler_params=pltpu.CompilerParams(
            dimension_semantics=("parallel",)),
    )(x, scale, shift, w9)


def _conv2_identity(y1, scale2, shift2, w9, residual):
    n, h, w, c = y1.shape
    cout = w9.shape[-1]
    return pl.pallas_call(
        _conv2_id_kernel,
        grid=(n,),
        in_specs=[pl.BlockSpec((1, h, w, c), lambda i: (i, 0, 0, 0)),
                  pl.BlockSpec((1, c), lambda i: (0, 0)),
                  pl.BlockSpec((1, c), lambda i: (0, 0)),
                  pl.BlockSpec((9, c, cout), lambda i: (0, 0, 0)),
                  pl.BlockSpec((1, h, w, cout), lambda i: (i, 0, 0, 0))],
        out_specs=pl.BlockSpec((1, h, w, cout), lambda i: (i, 0, 0, 0)),
        out_shape=jax.ShapeDtypeStruct((n, h, w, cout), jnp.float32),
        scratch_shapes=[pltpu.VMEM((h + 2, w + 2, c), jnp.float32)],
        compiler_params=pltpu.CompilerParams(
            dimension_semantics=("parallel",)),
    )(y1, scale2, shift2, w9, residual)


def _conv2_projection(y1, scale2, shift2, w9, xs, scale1, shift1, ws):
    n, h, w, c = y1.shape
    cout = w9.shape[-1]
    cin = xs.shape[-1]
    return pl.pallas_call(
        _conv2_proj_kernel,
        grid=(n,),
        in_specs=[pl.BlockSpec((1, h, w, c), lambda i: (i, 0, 0, 0)),
                  pl.BlockSpec((1, c), lambda i: (0, 0)),
                  pl.BlockSpec((1, c), lambda i: (0, 0)),
                  pl.BlockSpec((9, c, cout), lambda i: (0, 0, 0)),
                  pl.BlockSpec((1, h, w, cin), lambda i: (i, 0, 0, 0)),
                  pl.BlockSpec((1, cin), lambda i: (0, 0)),
                  pl.BlockSpec((1, cin), lambda i: (0, 0)),
                  pl.BlockSpec((cin, cout), lambda i: (0, 0))],
        out_specs=pl.BlockSpec((1, h, w, cout), lambda i: (i, 0, 0, 0)),
        out_shape=jax.ShapeDtypeStruct((n, h, w, cout), jnp.float32),
        scratch_shapes=[pltpu.VMEM((h + 2, w + 2, c), jnp.float32)],
        compiler_params=pltpu.CompilerParams(
            dimension_semantics=("parallel",)),
    )(y1, scale2, shift2, w9, xs, scale1, shift1, ws)


# ------------------------------- host-side glue --------------------------------

def wrn_basic_block(x, q, eps):
    """x: [N, H, W, Cin_pad] f32 (channels padded to LANE)."""
    n, h, w, cinp = x.shape
    stride = q["stride"]

    scale1, shift1 = _bn_scale_shift(x.reshape(n * h * w, cinp),
                                     q["bn1_gamma"], q["bn1_beta"], eps)
    out1 = _conv1(x, scale1, shift1, q["conv1_w9"], stride)
    _, ho, wo, coutp = out1.shape
    scale2, shift2 = _bn_scale_shift(out1.reshape(n * ho * wo, coutp),
                                     q["bn2_gamma"], q["bn2_beta"], eps)

    if q["identity"]:
        return _conv2_identity(out1, scale2, shift2, q["conv2_w9"], x)
    xs = x[:, ::stride, ::stride, :] if stride > 1 else x
    return _conv2_projection(out1, scale2, shift2, q["conv2_w9"],
                             xs, scale1, shift1, q["short_w"])


def init_wrn_network_block_params(key, nb_layers, in_planes, out_planes, stride):
    """Unpadded parameters mirroring the PyTorch module (used by both paths)."""
    params = []
    for layer in range(nb_layers):
        ip = in_planes if layer == 0 else out_planes
        st = stride if layer == 0 else 1
        key, k1, k2, k3 = jax.random.split(key, 4)
        p = {
            "bn1_gamma": jnp.ones((ip,), jnp.float32),
            "bn1_beta": jnp.zeros((ip,), jnp.float32),
            "conv1_w": jax.random.normal(k1, (3, 3, ip, out_planes), jnp.float32)
                       * jnp.sqrt(2.0 / (9 * ip)),
            "bn2_gamma": jnp.ones((out_planes,), jnp.float32),
            "bn2_beta": jnp.zeros((out_planes,), jnp.float32),
            "conv2_w": jax.random.normal(k2, (3, 3, out_planes, out_planes),
                                         jnp.float32)
                       * jnp.sqrt(2.0 / (9 * out_planes)),
            "stride": st,
        }
        if not ((ip == out_planes) and (st == 1)):
            p["short_w"] = (jax.random.normal(k3, (ip, out_planes), jnp.float32)
                            * jnp.sqrt(2.0 / ip))
        params.append(p)
    return params


def prepare_pallas_params(params, lane=LANE):
    """Pad channels to a lane multiple, pack conv weights as [9, Cin, Cout] bf16.

    Padded gamma/beta are zero, so padded lanes produce exactly-zero activations
    and never contaminate real channels.
    """
    prepared = []
    for p in params:
        cin, cout = p["conv1_w"].shape[2], p["conv1_w"].shape[3]
        cinp, coutp = _round_up(cin, lane), _round_up(cout, lane)

        def pad_vec(v, cp):
            return jnp.pad(v.reshape(1, -1), ((0, 0), (0, cp - v.shape[-1])))

        def pad_w3(wc, cip, cop):
            wc = jnp.pad(wc, ((0, 0), (0, 0),
                              (0, cip - wc.shape[2]), (0, cop - wc.shape[3])))
            return wc.reshape(9, cip, cop).astype(jnp.bfloat16)

        q = {
            "stride": p["stride"],
            "identity": (cin == cout) and (p["stride"] == 1),
            "cout": cout,
            "cinp": cinp,
            "coutp": coutp,
            "bn1_gamma": pad_vec(p["bn1_gamma"], cinp),
            "bn1_beta": pad_vec(p["bn1_beta"], cinp),
            "bn2_gamma": pad_vec(p["bn2_gamma"], coutp),
            "bn2_beta": pad_vec(p["bn2_beta"], coutp),
            "conv1_w9": pad_w3(p["conv1_w"], cinp, coutp),
            "conv2_w9": pad_w3(p["conv2_w"], coutp, coutp),
        }
        if not q["identity"]:
            sw = jnp.pad(p["short_w"], ((0, cinp - cin), (0, coutp - cout)))
            q["short_w"] = sw.astype(jnp.bfloat16)
        prepared.append(q)
    return prepared


def wrn_network_block(x_nchw, params, eps=1e-5):
    """Forward pass of WRNNetworkBlock (is_transposed=False, dropout=0.0)."""
    # TODO(synk): transposed-conv path (is_transposed=True / ConvTranspose2d) not implemented.
    prepared = prepare_pallas_params(params)
    x = jnp.transpose(x_nchw, (0, 2, 3, 1)).astype(jnp.float32)   # NCHW -> NHWC
    x = jnp.pad(x, ((0, 0), (0, 0), (0, 0),
                    (0, prepared[0]["cinp"] - x.shape[-1])))
    for q in prepared:
        x = wrn_basic_block(x, q, eps)
    x = x[..., :prepared[-1]["cout"]]                              # drop lane padding
    return jnp.transpose(x, (0, 3, 1, 2))                          # NHWC -> NCHW


# ----------------------------- pure-JAX reference ------------------------------

def _ref_bn_relu(x, gamma, beta, eps):
    mean = jnp.mean(x, axis=(0, 1, 2), keepdims=True)
    var = jnp.mean((x - mean) ** 2, axis=(0, 1, 2), keepdims=True)
    y = (x - mean) * jax.lax.rsqrt(var + eps) * gamma.reshape(1, 1, 1, -1) \
        + beta.reshape(1, 1, 1, -1)
    return jnp.maximum(y, 0.0)


def _ref_conv(x, w, stride, pad):
    return jax.lax.conv_general_dilated(
        x, w, window_strides=(stride, stride), padding=((pad, pad), (pad, pad)),
        dimension_numbers=("NHWC", "HWIO", "NHWC"))


def _ref_basic_block(x, p, stride, eps):
    cin, cout = x.shape[-1], p["conv1_w"].shape[-1]
    use_shortcut = (cin == cout) and (stride == 1)
    act = _ref_bn_relu(x, p["bn1_gamma"], p["bn1_beta"], eps)
    out = _ref_conv(act, p["conv1_w"], stride, 1)
    out = _ref_bn_relu(out, p["bn2_gamma"], p["bn2_beta"], eps)
    out = _ref_conv(out, p["conv2_w"], 1, 1)
    residual = x if use_shortcut else _ref_conv(act, p["short_w"][None, None],
                                                stride, 0)
    return residual + out


def ref_network_block(x_nchw, params, eps=1e-5):
    x = jnp.transpose(x_nchw, (0, 2, 3, 1))
    for p in params:
        x = _ref_basic_block(x, p, p["stride"], eps)
    return jnp.transpose(x, (0, 3, 1, 2))


# ------------------------------------ main --------------------------------------

if __name__ == "__main__":
    key = jax.random.PRNGKey(0)
    kx, kp = jax.random.split(key)

    # WRNNetworkBlock(nb_layers=2, in_planes=4, out_planes=8, block_type=WRNBasicBlock,
    #                 stride=1, dropout=0.0, is_transposed=False)
    N, Cin, H, W = 2, 4, 16, 16
    nb_layers, out_planes, stride = 2, 8, 1

    x = jax.random.normal(kx, (N, Cin, H, W), jnp.float32)
    params = init_wrn_network_block_params(kp, nb_layers, Cin, out_planes, stride)

    y = wrn_network_block(x, params)
    y = jax.block_until_ready(y)

    y_ref = ref_network_block(x, params)
    assert y.shape == y_ref.shape == (N, out_planes, H // stride, W // stride)

    max_err = float(jnp.max(jnp.abs(y - y_ref)))
    # tolerance scaled to output magnitude: Pallas path uses bf16 MXU operands
    # (f32 accumulation), reference is pure f32.
    tol = 2e-2 + 3e-2 * float(jnp.max(jnp.abs(y_ref)))
    if max_err < tol:
        print("KERNEL_OK")
    else:
        print(f"MISMATCH max_abs_err={max_err} tol={tol}")
</pallas_src>

<mosaic_0001>
module attributes {stable_mosaic.version = 11 : i64} {
  func.func @_bn_stats_kernel(%arg0: i32, %arg1: memref<512x128xf32, #tpu.memory_space<vmem>>, %arg2: memref<1x128xf32, #tpu.memory_space<vmem>>, %arg3: memref<1x128xf32, #tpu.memory_space<vmem>>, %arg4: memref<1x128xf32, #tpu.memory_space<vmem>>, %arg5: memref<1x128xf32, #tpu.memory_space<vmem>>, %arg6: memref<1x128xf32, #tpu.memory_space<vmem>>, %arg7: memref<1x128xf32, #tpu.memory_space<vmem>>) attributes {dimension_semantics = [#tpu.dimension_semantics<arbitrary>], iteration_bounds = array<i64: 1>, scalar_prefetch = 0 : i64, scratch_operands = 2 : i64, tpu.core_type = #tpu.core_type<tc>, window_params = [{transform_indices = @transform_0, window_bounds = array<i64: 512, 128>}, {pipeline_mode = #tpu.pipeline_mode<synchronous>, transform_indices = @transform_1, window_bounds = array<i64: 1, 128>}, {pipeline_mode = #tpu.pipeline_mode<synchronous>, transform_indices = @transform_2, window_bounds = array<i64: 1, 128>}, {pipeline_mode = #tpu.pipeline_mode<synchronous>, transform_indices = @transform_3, window_bounds = array<i64: 1, 128>}, {pipeline_mode = #tpu.pipeline_mode<synchronous>, transform_indices = @transform_4, window_bounds = array<i64: 1, 128>}]} {
    %c0_i32 = arith.constant 0 : i32
    %0 = arith.cmpi eq, %arg0, %c0_i32 : i32
    %1 = arith.extui %0 : i1 to i32
    %c0_i32_0 = arith.constant 0 : i32
    %2 = arith.cmpi ne, %1, %c0_i32_0 : i32
    scf.if %2 {
      %cst_13 = arith.constant 0.000000e+00 : f32
      %18 = vector.broadcast %cst_13 : f32 to vector<1x128xf32>
      %c0_14 = arith.constant 0 : index
      %c0_15 = arith.constant 0 : index
      %19 = vector.load %arg6[%c0_14, %c0_15] : memref<1x128xf32, #tpu.memory_space<vmem>>, vector<1x128xf32>
      tpu.vector_store %arg6[%c0_14, %c0_15], %18 {strides = array<i32>} : memref<1x128xf32, #tpu.memory_space<vmem>>, vector<1x128xf32>,
      %cst_16 = arith.constant 0.000000e+00 : f32
      %20 = vector.broadcast %cst_16 : f32 to vector<1x128xf32>
      %c0_17 = arith.constant 0 : index
      %c0_18 = arith.constant 0 : index
      %21 = vector.load %arg7[%c0_17, %c0_18] : memref<1x128xf32, #tpu.memory_space<vmem>>, vector<1x128xf32>
      tpu.vector_store %arg7[%c0_17, %c0_18], %20 {strides = array<i32>} : memref<1x128xf32, #tpu.memory_space<vmem>>, vector<1x128xf32>,
    } else {
    }
    %c0 = arith.constant 0 : index
    %c0_1 = arith.constant 0 : index
    %3 = vector.load %arg1[%c0, %c0_1] : memref<512x128xf32, #tpu.memory_space<vmem>>, vector<512x128xf32>
    %c0_2 = arith.constant 0 : index
    %c0_3 = arith.constant 0 : index
    %4 = vector.load %arg6[%c0_2, %c0_3] : memref<1x128xf32, #tpu.memory_space<vmem>>, vector<1x128xf32>
    %cst = arith.constant dense<0.000000e+00> : vector<128xf32>
    %5 = vector.multi_reduction <add>, %3, %cst [0] : vector<512x128xf32> to vector<128xf32>
    %6 = vector.shape_cast %5 : vector<128xf32> to vector<1x128xf32>
    %7 = arith.addf %4, %6 : vector<1x128xf32>
    %c0_4 = arith.constant 0 : index
    %c0_5 = arith.constant 0 : index
    %8 = vector.load %arg6[%c0_4, %c0_5] : memref<1x128xf32, #tpu.memory_space<vmem>>, vector<1x128xf32>
    tpu.vector_store %arg6[%c0_4, %c0_5], %7 {strides = array<i32>} : memref<1x128xf32, #tpu.memory_space<vmem>>, vector<1x128xf32>,
    %c0_6 = arith.constant 0 : index
    %c0_7 = arith.constant 0 : index
    %9 = vector.load %arg7[%c0_6, %c0_7] : memref<1x128xf32, #tpu.memory_space<vmem>>, vector<1x128xf32>
    %10 = arith.mulf %3, %3 : vector<512x128xf32>
    %cst_8 = arith.constant dense<0.000000e+00> : vector<128xf32>
    %11 = vector.multi_reduction <add>, %10, %cst_8 [0] : vector<512x128xf32> to vector<128xf32>
    %12 = vector.shape_cast %11 : vector<128xf32> to vector<1x128xf32>
    %13 = arith.addf %9, %12 : vector<1x128xf32>
    %c0_9 = arith.constant 0 : index
    %c0_10 = arith.constant 0 : index
    %14 = vector.load %arg7[%c0_9, %c0_10] : memref<1x128xf32, #tpu.memory_space<vmem>>, vector<1x128xf32>
    tpu.vector_store %arg7[%c0_9, %c0_10], %13 {strides = array<i32>} : memref<1x128xf32, #tpu.memory_space<vmem>>, vector<1x128xf32>,
    %c0_i32_11 = arith.constant 0 : i32
    %15 = arith.cmpi eq, %arg0, %c0_i32_11 : i32
    %16 = arith.extui %15 : i1 to i32
    %c0_i32_12 = arith.constant 0 : i32
    %17 = arith.cmpi ne, %16, %c0_i32_12 : i32
    scf.if %17 {
      %c0_13 = arith.constant 0 : index
      %c0_14 = arith.constant 0 : index
      %18 = vector.load %arg6[%c0_13, %c0_14] : memref<1x128xf32, #tpu.memory_space<vmem>>, vector<1x128xf32>
      %cst_15 = arith.constant 0.001953125 : f32
      %19 = vector.broadcast %cst_15 : f32 to vector<1x128xf32>
      %20 = arith.mulf %18, %19 : vector<1x128xf32>
      %c0_16 = arith.constant 0 : index
      %c0_17 = arith.constant 0 : index
      %21 = vector.load %arg7[%c0_16, %c0_17] : memref<1x128xf32, #tpu.memory_space<vmem>>, vector<1x128xf32>
      %cst_18 = arith.constant 0.001953125 : f32
      %22 = vector.broadcast %cst_18 : f32 to vector<1x128xf32>
      %23 = arith.mulf %21, %22 : vector<1x128xf32>
      %24 = arith.mulf %20, %20 : vector<1x128xf32>
      %25 = arith.subf %23, %24 : vector<1x128xf32>
      %cst_19 = arith.constant 0.000000e+00 : f32
      %26 = vector.broadcast %cst_19 : f32 to vector<1x128xf32>
      %27 = arith.maximumf %25, %26 : vector<1x128xf32>
      %c0_20 = arith.constant 0 : index
      %c0_21 = arith.constant 0 : index
      %28 = vector.load %arg2[%c0_20, %c0_21] : memref<1x128xf32, #tpu.memory_space<vmem>>, vector<1x128xf32>
      %cst_22 = arith.constant 9.99999974E-6 : f32
      %29 = vector.broadcast %cst_22 : f32 to vector<1x128xf32>
      %30 = arith.addf %27, %29 : vector<1x128xf32>
      %31 = math.rsqrt %30 : vector<1x128xf32>
      %32 = arith.mulf %28, %31 : vector<1x128xf32>
      %c0_23 = arith.constant 0 : index
      %c0_24 = arith.constant 0 : index
      %33 = vector.load %arg4[%c0_23, %c0_24] : memref<1x128xf32, #tpu.memory_space<vmem>>, vector<1x128xf32>
      tpu.vector_store %arg4[%c0_23, %c0_24], %32 {strides = array<i32>} : memref<1x128xf32, #tpu.memory_space<vmem>>, vector<1x128xf32>,
      %c0_25 = arith.constant 0 : index
      %c0_26 = arith.constant 0 : index
      %34 = vector.load %arg3[%c0_25, %c0_26] : memref<1x128xf32, #tpu.memory_space<vmem>>, vector<1x128xf32>
      %35 = arith.mulf %20, %32 : vector<1x128xf32>
      %36 = arith.subf %34, %35 : vector<1x128xf32>
      %c0_27 = arith.constant 0 : index
      %c0_28 = arith.constant 0 : index
      %37 = vector.load %arg5[%c0_27, %c0_28] : memref<1x128xf32, #tpu.memory_space<vmem>>, vector<1x128xf32>
      tpu.vector_store %arg5[%c0_27, %c0_28], %36 {strides = array<i32>} : memref<1x128xf32, #tpu.memory_space<vmem>>, vector<1x128xf32>,
    } else {
    }
    return
  }
  func.func @transform_0(%arg0: i32) -> (i32, i32) {
    %c0_i32 = arith.constant 0 : i32
    %c0_i32_0 = arith.constant 0 : i32
    return %arg0, %c0_i32 : i32, i32
  }
  func.func @transform_1(%arg0: i32) -> (i32, i32) {
    %c0_i32 = arith.constant 0 : i32
    %c0_i32_0 = arith.constant 0 : i32
    %c0_i32_1 = arith.constant 0 : i32
    return %c0_i32, %c0_i32_0 : i32, i32
  }
  func.func @transform_2(%arg0: i32) -> (i32, i32) {
    %c0_i32 = arith.constant 0 : i32
    %c0_i32_0 = arith.constant 0 : i32
    %c0_i32_1 = arith.constant 0 : i32
    return %c0_i32, %c0_i32_0 : i32, i32
  }
  func.func @transform_3(%arg0: i32) -> (i32, i32) {
    %c0_i32 = arith.constant 0 : i32
    %c0_i32_0 = arith.constant 0 : i32
    %c0_i32_1 = arith.constant 0 : i32
    return %c0_i32, %c0_i32_0 : i32, i32
  }
  func.func @transform_4(%arg0: i32) -> (i32, i32) {
    %c0_i32 = arith.constant 0 : i32
    %c0_i32_0 = arith.constant 0 : i32
    %c0_i32_1 = arith.constant 0 : i32
    return %c0_i32, %c0_i32_0 : i32, i32
  }
}

</mosaic_0001>

<llo_original>
// kernel: tpu_custom_call.1
$region0: #{tpu_custom_call.1}
  #allocation0 [shape = 'u32[]', space=smem, size = 0x4, offset = 0x4, fixed_abs, tag = 'smem constant byte address 0x4 - core index']
  #allocation1 [shape = 'u32[144,128]{1,0:T(1,128)}', space=vmem, size = 0x12000, scoped, tag = 'internal scratch']
  #allocation2 [shape = 'f32[1,128]{1,0:T(1,128)}', space=vmem, size = 0x200, scoped, tag = 'scratch operand']
  #allocation3 [shape = 'f32[1,128]{1,0:T(1,128)}', space=vmem, size = 0x200, scoped, tag = 'scratch operand']
  %s0 = inlined_call_operand.hbm [shape: f32[512,128], index: 0, kind: input, shape index: {}]
  %s1 = inlined_call_operand.vmem [shape: f32[1,128], index: 1, kind: input, shape index: {}]
  %s2 = inlined_call_operand.vmem [shape: f32[1,128], index: 2, kind: input, shape index: {}]
  %s3 = inlined_call_operand.hbm [shape: f32[1,128], index: 3, kind: output, shape index: {0}]
  %s4 = inlined_call_operand.hbm [shape: f32[1,128], index: 4, kind: output, shape index: {1}]
  %5 = xla_tuple %s3, %s4
  %s6 = sld [smem:[#allocation0]]
  $region42: #{tpu_custom_call.1} parent=0
    _
  %s8 = ssub.s32 1, %s6
  %s9 = scalar_select 0, %s8, %s6
  $region1: #{tpu_custom_call.1} parent=0
    #allocation4 [shape = 'u8[262144]{0}', space=vmem, size = 0x40000, scoped, tag = 'input window, operand 0, single buffered']
    #allocation5 [shape = 's32[1]{0}', space=sflag, size = 0x4, scoped, tag = 'scoped memory for tpu_custom_call.1']
    #allocation6 [shape = 's32[1]{0}', space=sflag, size = 0x4, scoped, tag = 'scoped memory for tpu_custom_call.1']
    #allocation7 [shape = 'u8[512]{0}', space=vmem, size = 0x400, scoped, tag = 'output window, operand 0, single buffered']
    #allocation8 [shape = 'u8[512]{0}', space=vmem, size = 0x400, scoped, tag = 'output window, operand 1, single buffered']
    #allocation9 [shape = 's32[1]{0}', space=sflag, size = 0x4, scoped, tag = 'scoped memory for tpu_custom_call.1']
    %10 = vsyncpa [#allocation5], 0
    %11 = vsyncpa [#allocation6], 0
    %12 = vsyncpa [#allocation9], 0
    // Predicated region
    $region2: #{tpu_custom_call.1} parent=1 // pred_check
      _
    $region3: #{tpu_custom_call.1} parent=1 // pred_check_branch
      %14 = sbr.rel (0) target = $region5
    $region4: #{tpu_custom_call.1} parent=1 // pred_region
      %s16 = ssub.s32 8192, 8192
      %17 = vsyncadd [#allocation5], %s16
      %s18 = sshll.u32 [#allocation4], 4
      %s19 = int_to_ptr.vmem [resolvable:$true] %s18
      %24 = dma.hbm_to_vmem [thread:$0]  %s0, 8192, %s19, [#allocation5], 128, 128, 8
    $region5: #{tpu_custom_call.1} parent=1 // pred_fallthru
      _
    // Predicated region
    $region6: #{tpu_custom_call.1} parent=1 // pred_check
      _
    $region7: #{tpu_custom_call.1} parent=1 // pred_check_branch
      %26 = sbr.rel (0) target = $region9
    $region8: #{tpu_custom_call.1} parent=1 // pred_region
      _
    $region9: #{tpu_custom_call.1} parent=1 // pred_fallthru
      _
    // Predicated region
    $region10: #{tpu_custom_call.1} parent=1 // pred_check
      _
    $region11: #{tpu_custom_call.1} parent=1 // pred_check_branch
      %28 = sbr.rel (0) target = $region13
    $region12: #{tpu_custom_call.1} parent=1 // pred_region
      _
    $region13: #{tpu_custom_call.1} parent=1 // pred_fallthru
      _
    // Predicated region
    $region14: #{tpu_custom_call.1} parent=1 // pred_check
      _
    $region15: #{tpu_custom_call.1} parent=1 // pred_check_branch
      %30 = sbr.rel (0) target = $region17
    $region16: #{tpu_custom_call.1} parent=1 // pred_region
      %31 = dma.done [#allocation5], 8192
    $region17: #{tpu_custom_call.1} parent=1 // pred_fallthru
      _
    %p32 = scmp.eq.s32.totalorder 0, 0
    // Predicated region
    $region18: #{tpu_custom_call.1} parent=1 // pred_check
      %p33 = pneg %p32
    $region19: #{tpu_custom_call.1} parent=1 // pred_check_branch
      %35 = sbr.rel (%p33) target = $region21
    $region20: #{tpu_custom_call.1} parent=1 // pred_region
      %36 = vst [vmem:[#allocation2] sm:$0x1] 0.0
      %37 = vst [vmem:[#allocation3] sm:$0x1] 0.0
    $region21: #{tpu_custom_call.1} parent=1 // pred_fallthru
      _
    %v38 = vld [vmem:[#allocation4] sm:$0xff]
    %v39 = vld [vmem:[#allocation4 + $0x8] sm:$0xff]
    %v40 = vld [vmem:[#allocation4 + $0x10] sm:$0xff]
    %v41 = vld [vmem:[#allocation4 + $0x18] sm:$0xff]
    %v42 = vld [vmem:[#allocation4 + $0x20] sm:$0xff]
    %v43 = vld [vmem:[#allocation4 + $0x28] sm:$0xff]
    %v44 = vld [vmem:[#allocation4 + $0x30] sm:$0xff]
    %v45 = vld [vmem:[#allocation4 + $0x38] sm:$0xff]
    %v46 = vld [vmem:[#allocation4 + $0x40] sm:$0xff]
    %v47 = vld [vmem:[#allocation4 + $0x48] sm:$0xff]
    %v48 = vld [vmem:[#allocation4 + $0x50] sm:$0xff]
    %v49 = vld [vmem:[#allocation4 + $0x58] sm:$0xff]
    %v50 = vld [vmem:[#allocation4 + $0x60] sm:$0xff]
    %v51 = vld [vmem:[#allocation4 + $0x68] sm:$0xff]
    %v52 = vld [vmem:[#allocation4 + $0x70] sm:$0xff]
    %v53 = vld [vmem:[#allocation4 + $0x78] sm:$0xff]
    %v54 = vld [vmem:[#allocation4 + $0x80] sm:$0xff]
    %v55 = vld [vmem:[#allocation4 + $0x88] sm:$0xff]
    %v56 = vld [vmem:[#allocation4 + $0x90] sm:$0xff]
    %v57 = vld [vmem:[#allocation4 + $0x98] sm:$0xff]
    %v58 = vld [vmem:[#allocation4 + $0xa0] sm:$0xff]
    %v59 = vld [vmem:[#allocation4 + $0xa8] sm:$0xff]
    %v60 = vld [vmem:[#allocation4 + $0xb0] sm:$0xff]
    %v61 = vld [vmem:[#allocation4 + $0xb8] sm:$0xff]
    %v62 = vld [vmem:[#allocation4 + $0xc0] sm:$0xff]
    %v63 = vld [vmem:[#allocation4 + $0xc8] sm:$0xff]
    %v64 = vld [vmem:[#allocation4 + $0xd0] sm:$0xff]
    %v65 = vld [vmem:[#allocation4 + $0xd8] sm:$0xff]
    %v66 = vld [vmem:[#allocation4 + $0xe0] sm:$0xff]
    %v67 = vld [vmem:[#allocation4 + $0xe8] sm:$0xff]
    %v68 = vld [vmem:[#allocation4 + $0xf0] sm:$0xff]
    %v69 = vld [vmem:[#allocation4 + $0xf8] sm:$0xff]
    %v70 = vld [vmem:[#allocation4 + $0x100] sm:$0xff]
    %v71 = vld [vmem:[#allocation4 + $0x108] sm:$0xff]
    %v72 = vld [vmem:[#allocation4 + $0x110] sm:$0xff]
    %v73 = vld [vmem:[#allocation4 + $0x118] sm:$0xff]
    %v74 = vld [vmem:[#allocation4 + $0x120] sm:$0xff]
    %v75 = vld [vmem:[#allocation4 + $0x128] sm:$0xff]
    %v76 = vld [vmem:[#allocation4 + $0x130] sm:$0xff]
    %v77 = vld [vmem:[#allocation4 + $0x138] sm:$0xff]
    %v78 = vld [vmem:[#allocation4 + $0x140] sm:$0xff]
    %v79 = vld [vmem:[#allocation4 + $0x148] sm:$0xff]
    %v80 = vld [vmem:[#allocation4 + $0x150] sm:$0xff]
    %v81 = vld [vmem:[#allocation4 + $0x158] sm:$0xff]
    %v82 = vld [vmem:[#allocation4 + $0x160] sm:$0xff]
    %v83 = vld [vmem:[#allocation4 + $0x168] sm:$0xff]
    %v84 = vld [vmem:[#allocation4 + $0x170] sm:$0xff]
    %v85 = vld [vmem:[#allocation4 + $0x178] sm:$0xff]
    %v86 = vld [vmem:[#allocation4 + $0x180] sm:$0xff]
    %v87 = vld [vmem:[#allocation4 + $0x188] sm:$0xff]
    %v88 = vld [vmem:[#allocation4 + $0x190] sm:$0xff]
    %v89 = vld [vmem:[#allocation4 + $0x198] sm:$0xff]
    %v90 = vld [vmem:[#allocation4 + $0x1a0] sm:$0xff]
    %v91 = vld [vmem:[#allocation4 + $0x1a8] sm:$0xff]
    %v92 = vld [vmem:[#allocation4 + $0x1b0] sm:$0xff]
    %v93 = vld [vmem:[#allocation4 + $0x1b8] sm:$0xff]
    %v94 = vld [vmem:[#allocation4 + $0x1c0] sm:$0xff]
    %v95 = vld [vmem:[#allocation4 + $0x1c8] sm:$0xff]
    %v96 = vld [vmem:[#allocation4 + $0x1d0] sm:$0xff]
    %v97 = vld [vmem:[#allocation4 + $0x1d8] sm:$0xff]
    %v98 = vld [vmem:[#allocation4 + $0x1e0] sm:$0xff]
    %v99 = vld [vmem:[#allocation4 + $0x1e8] sm:$0xff]
    %v100 = vld [vmem:[#allocation4 + $0x1f0] sm:$0xff]
    %v101 = vld [vmem:[#allocation4 + $0x1f8] sm:$0xff]
    %v102 = vld [vmem:[#allocation2] sm:$0x1]
    %v103 = vadd.f32 %v38, %v39
    %v104 = vadd.f32 %v103, %v40
    %v105 = vadd.f32 %v104, %v41
    %v106 = vadd.f32 %v105, %v42
    %v107 = vadd.f32 %v106, %v43
    %v108 = vadd.f32 %v107, %v44
    %v109 = vadd.f32 %v108, %v45
    %v110 = vadd.f32 %v109, %v46
    %v111 = vadd.f32 %v110, %v47
    %v112 = vadd.f32 %v111, %v48
    %v113 = vadd.f32 %v112, %v49
    %v114 = vadd.f32 %v113, %v50
    %v115 = vadd.f32 %v114, %v51
    %v116 = vadd.f32 %v115, %v52
    %v117 = vadd.f32 %v116, %v53
    %v118 = vadd.f32 %v117, %v54
    %v119 = vadd.f32 %v118, %v55
    %v120 = vadd.f32 %v119, %v56
    %v121 = vadd.f32 %v120, %v57
    %v122 = vadd.f32 %v121, %v58
    %v123 = vadd.f32 %v122, %v59
    %v124 = vadd.f32 %v123, %v60
    %v125 = vadd.f32 %v124, %v61
    %v126 = vadd.f32 %v125, %v62
    %v127 = vadd.f32 %v126, %v63
    %v128 = vadd.f32 %v127, %v64
    %v129 = vadd.f32 %v128, %v65
    %v130 = vadd.f32 %v129, %v66
    %v131 = vadd.f32 %v130, %v67
    %v132 = vadd.f32 %v131, %v68
    %v133 = vadd.f32 %v132, %v69
    %v134 = vadd.f32 %v133, %v70
    %v135 = vadd.f32 %v134, %v71
    %v136 = vadd.f32 %v135, %v72
    %v137 = vadd.f32 %v136, %v73
    %v138 = vadd.f32 %v137, %v74
    %v139 = vadd.f32 %v138, %v75
    %v140 = vadd.f32 %v139, %v76
    %v141 = vadd.f32 %v140, %v77
    %v142 = vadd.f32 %v141, %v78
    %v143 = vadd.f32 %v142, %v79
    %v144 = vadd.f32 %v143, %v80
    %v145 = vadd.f32 %v144, %v81
    %v146 = vadd.f32 %v145, %v82
    %v147 = vadd.f32 %v146, %v83
    %v148 = vadd.f32 %v147, %v84
    %v149 = vadd.f32 %v148, %v85
    %v150 = vadd.f32 %v149, %v86
    %v151 = vadd.f32 %v150, %v87
    %v152 = vadd.f32 %v151, %v88
    %v153 = vadd.f32 %v152, %v89
    %v154 = vadd.f32 %v153, %v90
    %v155 = vadd.f32 %v154, %v91
    %v156 = vadd.f32 %v155, %v92
    %v157 = vadd.f32 %v156, %v93
    %v158 = vadd.f32 %v157, %v94
    %v159 = vadd.f32 %v158, %v95
    %v160 = vadd.f32 %v159, %v96
    %v161 = vadd.f32 %v160, %v97
    %v162 = vadd.f32 %v161, %v98
    %v163 = vadd.f32 %v162, %v99
    %v164 = vadd.f32 %v163, %v100
    %v165 = vadd.f32 %v164, %v101
    %v166 = vrot.slane %v165, 4
    %v167 = vadd.f32 %v165, %v166
    %v168 = vrot.slane %v167, 2
    %v169 = vadd.f32 %v167, %v168
    %v170 = vrot.slane %v169, 1
    %v171 = vadd.f32 %v169, %v170
    %v172 = vadd.f32 %v102, %v171
    %173 = vst [vmem:[#allocation2] sm:$0x1] %v172
    %v174 = vld [vmem:[#allocation3] sm:$0x1]
    %v175 = vmul.f32 %v38, %v38
    %v176 = vmul.f32 %v39, %v39
    %v177 = vmul.f32 %v40, %v40
    %v178 = vmul.f32 %v41, %v41
    %v179 = vmul.f32 %v42, %v42
    %v180 = vmul.f32 %v43, %v43
    %v181 = vmul.f32 %v44, %v44
    %v182 = vmul.f32 %v45, %v45
    %v183 = vmul.f32 %v46, %v46
    %v184 = vmul.f32 %v47, %v47
    %v185 = vmul.f32 %v48, %v48
    %v186 = vmul.f32 %v49, %v49
    %v187 = vmul.f32 %v50, %v50
    %v188 = vmul.f32 %v51, %v51
    %v189 = vmul.f32 %v52, %v52
    %v190 = vmul.f32 %v53, %v53
    %v191 = vmul.f32 %v54, %v54
    %v192 = vmul.f32 %v55, %v55
    %v193 = vmul.f32 %v56, %v56
    %v194 = vmul.f32 %v57, %v57
    %v195 = vmul.f32 %v58, %v58
    %v196 = vmul.f32 %v59, %v59
    %v197 = vmul.f32 %v60, %v60
    %v198 = vmul.f32 %v61, %v61
    %v199 = vmul.f32 %v62, %v62
    %v200 = vmul.f32 %v63, %v63
    %v201 = vmul.f32 %v64, %v64
    %v202 = vmul.f32 %v65, %v65
    %v203 = vmul.f32 %v66, %v66
    %v204 = vmul.f32 %v67, %v67
    %v205 = vmul.f32 %v68, %v68
    %v206 = vmul.f32 %v69, %v69
    %v207 = vmul.f32 %v70, %v70
    %v208 = vmul.f32 %v71, %v71
    %v209 = vmul.f32 %v72, %v72
    %v210 = vmul.f32 %v73, %v73
    %v211 = vmul.f32 %v74, %v74
    %v212 = vmul.f32 %v75, %v75
    %v213 = vmul.f32 %v76, %v76
    %v214 = vmul.f32 %v77, %v77
    %v215 = vmul.f32 %v78, %v78
    %v216 = vmul.f32 %v79, %v79
    %v217 = vmul.f32 %v80, %v80
    %v218 = vmul.f32 %v81, %v81
    %v219 = vmul.f32 %v82, %v82
    %v220 = vmul.f32 %v83, %v83
    %v221 = vmul.f32 %v84, %v84
    %v222 = vmul.f32 %v85, %v85
    %v223 = vmul.f32 %v86, %v86
    %v224 = vmul.f32 %v87, %v87
    %v225 = vmul.f32 %v88, %v88
    %v226 = vmul.f32 %v89, %v89
    %v227 = vmul.f32 %v90, %v90
    %v228 = vmul.f32 %v91, %v91
    %v229 = vmul.f32 %v92, %v92
    %v230 = vmul.f32 %v93, %v93
    %v231 = vmul.f32 %v94, %v94
    %v232 = vmul.f32 %v95, %v95
    %v233 = vmul.f32 %v96, %v96
    %v234 = vmul.f32 %v97, %v97
    %v235 = vmul.f32 %v98, %v98
    %v236 = vmul.f32 %v99, %v99
    %v237 = vmul.f32 %v100, %v100
    %v238 = vmul.f32 %v101, %v101
    %v239 = vadd.f32 %v175, %v176
    %v240 = vadd.f32 %v239, %v177
    %v241 = vadd.f32 %v240, %v178
    %v242 = vadd.f32 %v241, %v179
    %v243 = vadd.f32 %v242, %v180
    %v244 = vadd.f32 %v243, %v181
    %v245 = vadd.f32 %v244, %v182
    %v246 = vadd.f32 %v245, %v183
    %v247 = vadd.f32 %v246, %v184
    %v248 = vadd.f32 %v247, %v185
    %v249 = vadd.f32 %v248, %v186
    %v250 = vadd.f32 %v249, %v187
    %v251 = vadd.f32 %v250, %v188
    %v252 = vadd.f32 %v251, %v189
    %v253 = vadd.f32 %v252, %v190
    %v254 = vadd.f32 %v253, %v191
    %v255 = vadd.f32 %v254, %v192
    %v256 = vadd.f32 %v255, %v193
    %v257 = vadd.f32 %v256, %v194
    %v258 = vadd.f32 %v257, %v195
    %v259 = vadd.f32 %v258, %v196
    %v260 = vadd.f32 %v259, %v197
    %v261 = vadd.f32 %v260, %v198
    %v262 = vadd.f32 %v261, %v199
    %v263 = vadd.f32 %v262, %v200
    %v264 = vadd.f32 %v263, %v201
    %v265 = vadd.f32 %v264, %v202
    %v266 = vadd.f32 %v265, %v203
    %v267 = vadd.f32 %v266, %v204
    %v268 = vadd.f32 %v267, %v205
    %v269 = vadd.f32 %v268, %v206
    %v270 = vadd.f32 %v269, %v207
    %v271 = vadd.f32 %v270, %v208
    %v272 = vadd.f32 %v271, %v209
    %v273 = vadd.f32 %v272, %v210
    %v274 = vadd.f32 %v273, %v211
    %v275 = vadd.f32 %v274, %v212
    %v276 = vadd.f32 %v275, %v213
    %v277 = vadd.f32 %v276, %v214
    %v278 = vadd.f32 %v277, %v215
    %v279 = vadd.f32 %v278, %v216
    %v280 = vadd.f32 %v279, %v217
    %v281 = vadd.f32 %v280, %v218
    %v282 = vadd.f32 %v281, %v219
    %v283 = vadd.f32 %v282, %v220
    %v284 = vadd.f32 %v283, %v221
    %v285 = vadd.f32 %v284, %v222
    %v286 = vadd.f32 %v285, %v223
    %v287 = vadd.f32 %v286, %v224
    %v288 = vadd.f32 %v287, %v225
    %v289 = vadd.f32 %v288, %v226
    %v290 = vadd.f32 %v289, %v227
    %v291 = vadd.f32 %v290, %v228
    %v292 = vadd.f32 %v291, %v229
    %v293 = vadd.f32 %v292, %v230
    %v294 = vadd.f32 %v293, %v231
    %v295 = vadd.f32 %v294, %v232
    %v296 = vadd.f32 %v295, %v233
    %v297 = vadd.f32 %v296, %v234
    %v298 = vadd.f32 %v297, %v235
    %v299 = vadd.f32 %v298, %v236
    %v300 = vadd.f32 %v299, %v237
    %v301 = vadd.f32 %v300, %v238
    %v302 = vrot.slane %v301, 4
    %v303 = vadd.f32 %v301, %v302
    %v304 = vrot.slane %v303, 2
    %v305 = vadd.f32 %v303, %v304
    %v306 = vrot.slane %v305, 1
    %v307 = vadd.f32 %v305, %v306
    %v308 = vadd.f32 %v174, %v307
    %309 = vst [vmem:[#allocation3] sm:$0x1] %v308
    // Predicated region
    $region22: #{tpu_custom_call.1} parent=1 // pred_check
      %p310 = pneg %p32
    $region23: #{tpu_custom_call.1} parent=1 // pred_check_branch
      %312 = sbr.rel (%p310) target = $region25
    $region24: #{tpu_custom_call.1} parent=1 // pred_region
      %v313 = vld [vmem:[#allocation2] sm:$0x1]
      %v314 = vmul.f32 %v313, 0.001953125
      %v315 = vld [vmem:[#allocation3] sm:$0x1]
      %v316 = vmul.f32 %v315, 0.001953125
      %v317 = vmul.f32 %v314, %v314
      %v318 = vsub.f32 %v316, %v317
      %v319 = vmax.f32 %v318, 0.0
      %v320 = vld [vmem:[%s1] sm:$0x1]
      %v321 = vadd.f32 %v319, 1e-05
      %v322 = vrsqrt.pop %v321
      %v323 = vmul.f32 %v320, %v322
      %324 = vst [vmem:[#allocation7] sm:$0x1] %v323
      %v325 = vld [vmem:[%s2] sm:$0x1]
      %v326 = vmul.f32 %v314, %v323
      %v327 = vsub.f32 %v325, %v326
      %328 = vst [vmem:[#allocation8] sm:$0x1] %v327
    $region25: #{tpu_custom_call.1} parent=1 // pred_fallthru
      _
    // Predicated region
    $region26: #{tpu_custom_call.1} parent=1 // pred_check
      _
    $region27: #{tpu_custom_call.1} parent=1 // pred_check_branch
      %330 = sbr.rel (0) target = $region29
    $region28: #{tpu_custom_call.1} parent=1 // pred_region
      %s332 = ssub.s32 16, 16
      %333 = vsyncadd [#allocation6], %s332
      %s335 = sshll.u32 [#allocation7], 4
      %s336 = int_to_ptr.vmem [resolvable:$true] %s335
      %338 = dma.vmem_to_hbm [thread:$0]  %s336, 16, %s3, [#allocation6]
    $region29: #{tpu_custom_call.1} parent=1 // pred_fallthru
      _
    // Predicated region
    $region30: #{tpu_custom_call.1} parent=1 // pred_check
      _
    $region31: #{tpu_custom_call.1} parent=1 // pred_check_branch
      %340 = sbr.rel (0) target = $region33
    $region32: #{tpu_custom_call.1} parent=1 // pred_region
      %s342 = ssub.s32 16, 16
      %343 = vsyncadd [#allocation9], %s342
      %s345 = sshll.u32 [#allocation8], 4
      %s346 = int_to_ptr.vmem [resolvable:$true] %s345
      %348 = dma.vmem_to_hbm [thread:$0]  %s346, 16, %s4, [#allocation9]
    $region33: #{tpu_custom_call.1} parent=1 // pred_fallthru
      _
    // Predicated region
    $region34: #{tpu_custom_call.1} parent=1 // pred_check
      _
    $region35: #{tpu_custom_call.1} parent=1 // pred_check_branch
      %350 = sbr.rel (0) target = $region37
    $region36: #{tpu_custom_call.1} parent=1 // pred_region
      %351 = dma.done [#allocation6], 16
    $region37: #{tpu_custom_call.1} parent=1 // pred_fallthru
      _
    // Predicated region
    $region38: #{tpu_custom_call.1} parent=1 // pred_check
      _
    $region39: #{tpu_custom_call.1} parent=1 // pred_check_branch
      %353 = sbr.rel (0) target = $region41
    $region40: #{tpu_custom_call.1} parent=1 // pred_region
      %354 = dma.done [#allocation9], 16
    $region41: #{tpu_custom_call.1} parent=1 // pred_fallthru
      _
    %355 = vsyncpa [#allocation5], 1
    %356 = vsyncpa [#allocation6], 1
    %357 = vsyncpa [#allocation9], 1

</llo_original>
